<compile_context>
chip_gen: v6e
topology: v6e:2x2x1
jax: 0.10.0
libtpu: 0.0.40
codegen_flags: <defaults>
</compile_context>

<pallas_src>
import jax
import jax.numpy as jnp
from jax.experimental import pallas as pl
from jax.experimental.pallas import tpu as pltpu

LN_EPS = 1e-5


def _round_up(x, m):
    return (x + m - 1) // m * m


# ------------------------------ Fused block kernel ---------------------------
def _make_block_kernel(C, H, W, C1, C2, Nb, cp, normalize):
    """One grid step processes Nb images end-to-end (LN -> conv1+SiLU -> conv2+SiLU).

    cp : channel count padded to a multiple of 8 (shared by both convs)
    K  : 9*cp tap rows + 8 bias rows = im2col sublane extent
    """
    HW = H * W
    K = 9 * cp + 8

    # Static tap table in tap-major (kh, kw) order; flattened lane offset = dy*W + dx.
    taps = []
    for dy in (-1, 0, 1):
        for dx in (-1, 0, 1):
            taps.append((dy * W + dx, dy == 0 and dx == 0))

    def kernel(x_ref, g_ref, bln_ref, m_ref, w1_ref, w2_ref, o_ref, col_ref):
        g = g_ref[...].astype(jnp.float32)          # (cp, HW)
        bln = bln_ref[...].astype(jnp.float32)      # (cp, HW)
        w1 = w1_ref[...].astype(jnp.float32)        # (C1, K)
        w2 = w2_ref[...].astype(jnp.float32)        # (C2, K)

        # Hoist the 8 boundary masks (constant across images / convs).
        masks = [None] * 9
        for k, (off, is_center) in enumerate(taps):
            if not is_center:
                masks[k] = m_ref[k].astype(jnp.float32)       # (cp, HW)

        # Extra im2col rows that fold the conv bias into the matmul:
        # row 0 multiplies the bias column (ones); rows 1..7 are zero pad.
        bias_rows = (jax.lax.broadcasted_iota(jnp.int32, (8, HW), 0) == 0
                     ).astype(jnp.float32)

        def conv3x3_silu(inp, w):
            # inp: (cp, HW) f32 with zeros in any pad-channel rows.
            # Build im2col (K, HW) in VMEM: 9 aligned (cp, HW) tap stores + bias rows.
            for k, (off, is_center) in enumerate(taps):
                if is_center:
                    src = inp
                else:
                    # shifted[c, p] = inp[c, p + off]; wrap / out-of-image -> masked 0
                    src = pltpu.roll(inp, (-off) % HW, axis=1) * masks[k]
                col_ref[pl.ds(k * cp, cp), :] = src
            col_ref[pl.ds(9 * cp, 8), :] = bias_rows
            # Single MXU matmul per conv (bias already folded in), then SiLU.
            acc = jnp.dot(w, col_ref[...], preferred_element_type=jnp.float32)
            return acc * jax.nn.sigmoid(acc)

        for n in range(Nb):
            x = x_ref[n].astype(jnp.float32)         # (cp, HW); pad rows are zero
            if normalize:
                # torch nn.LayerNorm over (C, H, W) jointly; one-pass statistics.
                d = jnp.float32(C * HW)              # real (unpadded) element count
                s1 = jnp.sum(x)
                s2 = jnp.sum(x * x)
                mean = s1 / d
                var = s2 / d - mean * mean
                inv = jax.lax.rsqrt(var + LN_EPS)
                # gamma/beta are zero in pad rows, so pad rows stay exactly zero.
                y = (x - mean) * inv * g + bln
            else:
                y = x

            h1 = conv3x3_silu(y, w1)                 # (C1, HW)
            if cp > C1:                              # re-pad channels for conv2
                h1 = jnp.concatenate(
                    [h1, jnp.zeros((cp - C1, HW), jnp.float32)], axis=0)
            out = conv3x3_silu(h1, w2)               # (C2, HW)
            o_ref[n] = out.astype(o_ref.dtype)

    return kernel


# ------------------------------ Host-side helpers -----------------------------
def _build_weight_slab(w_oihw, bias, cp):
    """Torch OIHW 3x3 weights + bias -> (Cout, 9*cp + 8) tap-major slab.

    slab[o, k*cp + i] = w[o, i, kh, kw] with k = kh*3 + kw  (zeros for i >= Cin)
    slab[o, 9*cp]     = bias[o]; the remaining 7 columns are zero pad.
    """
    cout, cin, kh, kw = w_oihw.shape
    assert kh == 3 and kw == 3
    w_t = jnp.transpose(w_oihw, (0, 2, 3, 1))                         # (cout, 3, 3, cin)
    w_t = jnp.pad(w_t, ((0, 0), (0, 0), (0, 0), (0, cp - cin)))
    w_flat = w_t.reshape(cout, 9 * cp)
    bias_block = jnp.zeros((cout, 8), w_flat.dtype).at[:, 0].set(bias)
    return jnp.concatenate([w_flat, bias_block], axis=1)


def _build_masks(H, W, cp):
    """Constant (9, cp, H*W) f32 validity masks for the 9 conv taps (padding=1)."""
    HW = H * W
    pos = jnp.arange(HW, dtype=jnp.int32)
    row = pos // W
    col = pos % W
    ms = []
    for dy in (-1, 0, 1):
        for dx in (-1, 0, 1):
            m = jnp.ones((HW,), jnp.float32)
            if dy == -1:
                m = m * (row >= 1)
            elif dy == 1:
                m = m * (row <= H - 2)
            if dx == -1:
                m = m * (col >= 1)
            elif dx == 1:
                m = m * (col <= W - 2)
            ms.append(m)
    masks = jnp.stack(ms).astype(jnp.float32)                         # (9, HW)
    return jnp.tile(masks[:, None, :], (1, cp, 1))                    # (9, cp, HW)


def _images_per_block(N):
    """Batch block size per TPU generation (fold the batch on single-TC chips)."""
    if N <= 1:
        return max(N, 1)
    kind = ""
    try:
        kind = jax.devices()[0].device_kind.lower()
    except Exception:
        pass
    single_tc = any(t in kind for t in ("v5e", "v5 lite", "v6e", "v6 lite"))
    if single_tc:
        return N                          # one grid step: no per-step overhead
    nb = max(N // 2, 1)                   # v7x / megacore: keep >= 2 parallel steps
    while N % nb:
        nb -= 1
    return nb


# ------------------------------- MyBlock forward -----------------------------
def myblock_forward(x_nchw, params, normalize=True, images_per_block=None):
    N, C, H, W = x_nchw.shape
    HW = H * W
    C1 = params["w1"].shape[0]
    C2 = params["w2"].shape[0]
    cp = max(_round_up(C, 8), _round_up(C1, 8))       # shared padded channel count
    K = 9 * cp + 8

    Nb = _images_per_block(N) if images_per_block is None else images_per_block
    assert N % Nb == 0

    # Pure reshape keeps H*W on the lane axis; channel zero-pad keeps every sublane
    # store / MXU operand 8-aligned (pad rows/cols contribute exact zeros).
    x2 = jnp.pad(x_nchw.reshape(N, C, HW), ((0, 0), (0, cp - C), (0, 0)))
    g2 = jnp.pad(params["ln_g"].reshape(C, HW), ((0, cp - C), (0, 0)))
    bln2 = jnp.pad(params["ln_b"].reshape(C, HW), ((0, cp - C), (0, 0)))
    masks = _build_masks(H, W, cp)                    # (9, cp, HW) constant
    w1s = _build_weight_slab(params["w1"], params["b1"], cp)   # (C1, K)
    w2s = _build_weight_slab(params["w2"], params["b2"], cp)   # (C2, K)

    kernel = _make_block_kernel(C, H, W, C1, C2, Nb, cp, normalize)
    out = pl.pallas_call(
        kernel,
        out_shape=jax.ShapeDtypeStruct((N, C2, HW), x_nchw.dtype),
        grid=(N // Nb,),
        in_specs=[
            pl.BlockSpec((Nb, cp, HW), lambda i: (i, 0, 0)),     # x (Nb images)
            pl.BlockSpec((cp, HW), lambda i: (0, 0)),            # LN gamma (padded)
            pl.BlockSpec((cp, HW), lambda i: (0, 0)),            # LN beta  (padded)
            pl.BlockSpec((9, cp, HW), lambda i: (0, 0, 0)),      # boundary masks
            pl.BlockSpec((C1, K), lambda i: (0, 0)),             # conv1 weight slab
            pl.BlockSpec((C2, K), lambda i: (0, 0)),             # conv2 weight slab
        ],
        out_specs=pl.BlockSpec((Nb, C2, HW), lambda i: (i, 0, 0)),
        scratch_shapes=[pltpu.VMEM((K, HW), jnp.float32)],       # im2col slab
        compiler_params=pltpu.CompilerParams(
            dimension_semantics=("parallel",)),
    )(x2, g2, bln2, masks, w1s, w2s)
    return out.reshape(N, C2, H, W)


# --------------------------------- Reference ---------------------------------
def reference_forward(x, params):
    N = x.shape[0]
    xf = x.reshape(N, -1)
    mean = xf.mean(-1).reshape(N, 1, 1, 1)
    var = ((x - mean) ** 2).reshape(N, -1).mean(-1).reshape(N, 1, 1, 1)
    y = (x - mean) / jnp.sqrt(var + LN_EPS) * params["ln_g"][None] + params["ln_b"][None]

    def conv(z, w, b):
        out = jax.lax.conv_general_dilated(
            z, w, (1, 1), ((1, 1), (1, 1)),
            dimension_numbers=("NCHW", "OIHW", "NCHW"))
        return out + b.reshape(1, -1, 1, 1)

    y = conv(y, params["w1"], params["b1"])
    y = y * jax.nn.sigmoid(y)
    y = conv(y, params["w2"], params["b2"])
    y = y * jax.nn.sigmoid(y)
    return y


if __name__ == "__main__":
    # Shapes consistent with the module: shape=(C,H,W)=(4,16,16), in_c=4, out_c=8
    N, C, H, W = 2, 4, 16, 16
    OUT_C = 8

    key = jax.random.PRNGKey(0)
    k_x, k_g, k_b, k_w1, k_b1, k_w2, k_b2 = jax.random.split(key, 7)

    x = jax.random.normal(k_x, (N, C, H, W), dtype=jnp.float32)

    params = {
        # LayerNorm affine params over (C, H, W)
        "ln_g": 1.0 + 0.1 * jax.random.normal(k_g, (C, H, W), dtype=jnp.float32),
        "ln_b": 0.1 * jax.random.normal(k_b, (C, H, W), dtype=jnp.float32),
        # conv1: in_c -> out_c, 3x3, stride 1, pad 1 (torch OIHW weight layout)
        "w1": 0.2 * jax.random.normal(k_w1, (OUT_C, C, 3, 3), dtype=jnp.float32),
        "b1": 0.1 * jax.random.normal(k_b1, (OUT_C,), dtype=jnp.float32),
        # conv2: out_c -> out_c
        "w2": 0.2 * jax.random.normal(k_w2, (OUT_C, OUT_C, 3, 3), dtype=jnp.float32),
        "b2": 0.1 * jax.random.normal(k_b2, (OUT_C,), dtype=jnp.float32),
    }

    out = myblock_forward(x, params)
    out = jax.block_until_ready(out)

    ref = jax.block_until_ready(reference_forward(x, params))
    assert out.shape == (N, OUT_C, H, W), out.shape
    assert jnp.allclose(out, ref, atol=1e-4, rtol=1e-4), float(jnp.max(jnp.abs(out - ref)))

    print("KERNEL_OK")
</pallas_src>

<mosaic_0001>
module attributes {stable_mosaic.version = 11 : i64} {
  func.func @kernel(%arg0: i32, %arg1: memref<1x8x256xf32, #tpu.memory_space<vmem>>, %arg2: memref<8x256xf32, #tpu.memory_space<vmem>>, %arg3: memref<8x256xf32, #tpu.memory_space<vmem>>, %arg4: memref<9x8x256xf32, #tpu.memory_space<vmem>>, %arg5: memref<8x80xf32, #tpu.memory_space<vmem>>, %arg6: memref<8x80xf32, #tpu.memory_space<vmem>>, %arg7: memref<1x8x256xf32, #tpu.memory_space<vmem>>, %arg8: memref<80x256xf32, #tpu.memory_space<vmem>>) attributes {dimension_semantics = [#tpu.dimension_semantics<parallel>], iteration_bounds = array<i64: 2>, scalar_prefetch = 0 : i64, scratch_operands = 1 : i64, tpu.core_type = #tpu.core_type<tc>, window_params = [{transform_indices = @transform_0, window_bounds = array<i64: 1, 8, 256>}, {pipeline_mode = #tpu.pipeline_mode<synchronous>, transform_indices = @transform_1, window_bounds = array<i64: 8, 256>}, {pipeline_mode = #tpu.pipeline_mode<synchronous>, transform_indices = @transform_2, window_bounds = array<i64: 8, 256>}, {pipeline_mode = #tpu.pipeline_mode<synchronous>, transform_indices = @transform_3, window_bounds = array<i64: 9, 8, 256>}, {pipeline_mode = #tpu.pipeline_mode<synchronous>, transform_indices = @transform_4, window_bounds = array<i64: 8, 80>}, {pipeline_mode = #tpu.pipeline_mode<synchronous>, transform_indices = @transform_5, window_bounds = array<i64: 8, 80>}, {transform_indices = @transform_6, window_bounds = array<i64: 1, 8, 256>}]} {
    %c0 = arith.constant 0 : index
    %c0_0 = arith.constant 0 : index
    %0 = vector.load %arg2[%c0, %c0_0] : memref<8x256xf32, #tpu.memory_space<vmem>>, vector<8x256xf32>
    %c0_1 = arith.constant 0 : index
    %c0_2 = arith.constant 0 : index
    %1 = vector.load %arg3[%c0_1, %c0_2] : memref<8x256xf32, #tpu.memory_space<vmem>>, vector<8x256xf32>
    %c0_3 = arith.constant 0 : index
    %c0_4 = arith.constant 0 : index
    %2 = vector.load %arg5[%c0_3, %c0_4] : memref<8x80xf32, #tpu.memory_space<vmem>>, vector<8x80xf32>
    %c0_5 = arith.constant 0 : index
    %c0_6 = arith.constant 0 : index
    %3 = vector.load %arg6[%c0_5, %c0_6] : memref<8x80xf32, #tpu.memory_space<vmem>>, vector<8x80xf32>
    %c0_7 = arith.constant 0 : index
    %c0_8 = arith.constant 0 : index
    %c0_9 = arith.constant 0 : index
    %4 = vector.load %arg4[%c0_7, %c0_8, %c0_9] : memref<9x8x256xf32, #tpu.memory_space<vmem>>, vector<1x8x256xf32>
    %5 = vector.shape_cast %4 : vector<1x8x256xf32> to vector<8x256xf32>
    %c1 = arith.constant 1 : index
    %c0_10 = arith.constant 0 : index
    %c0_11 = arith.constant 0 : index
    %6 = vector.load %arg4[%c1, %c0_10, %c0_11] : memref<9x8x256xf32, #tpu.memory_space<vmem>>, vector<1x8x256xf32>
    %7 = vector.shape_cast %6 : vector<1x8x256xf32> to vector<8x256xf32>
    %c2 = arith.constant 2 : index
    %c0_12 = arith.constant 0 : index
    %c0_13 = arith.constant 0 : index
    %8 = vector.load %arg4[%c2, %c0_12, %c0_13] : memref<9x8x256xf32, #tpu.memory_space<vmem>>, vector<1x8x256xf32>
    %9 = vector.shape_cast %8 : vector<1x8x256xf32> to vector<8x256xf32>
    %c3 = arith.constant 3 : index
    %c0_14 = arith.constant 0 : index
    %c0_15 = arith.constant 0 : index
    %10 = vector.load %arg4[%c3, %c0_14, %c0_15] : memref<9x8x256xf32, #tpu.memory_space<vmem>>, vector<1x8x256xf32>
    %11 = vector.shape_cast %10 : vector<1x8x256xf32> to vector<8x256xf32>
    %c5 = arith.constant 5 : index
    %c0_16 = arith.constant 0 : index
    %c0_17 = arith.constant 0 : index
    %12 = vector.load %arg4[%c5, %c0_16, %c0_17] : memref<9x8x256xf32, #tpu.memory_space<vmem>>, vector<1x8x256xf32>
    %13 = vector.shape_cast %12 : vector<1x8x256xf32> to vector<8x256xf32>
    %c6 = arith.constant 6 : index
    %c0_18 = arith.constant 0 : index
    %c0_19 = arith.constant 0 : index
    %14 = vector.load %arg4[%c6, %c0_18, %c0_19] : memref<9x8x256xf32, #tpu.memory_space<vmem>>, vector<1x8x256xf32>
    %15 = vector.shape_cast %14 : vector<1x8x256xf32> to vector<8x256xf32>
    %c7 = arith.constant 7 : index
    %c0_20 = arith.constant 0 : index
    %c0_21 = arith.constant 0 : index
    %16 = vector.load %arg4[%c7, %c0_20, %c0_21] : memref<9x8x256xf32, #tpu.memory_space<vmem>>, vector<1x8x256xf32>
    %17 = vector.shape_cast %16 : vector<1x8x256xf32> to vector<8x256xf32>
    %c8 = arith.constant 8 : index
    %c0_22 = arith.constant 0 : index
    %c0_23 = arith.constant 0 : index
    %18 = vector.load %arg4[%c8, %c0_22, %c0_23] : memref<9x8x256xf32, #tpu.memory_space<vmem>>, vector<1x8x256xf32>
    %19 = vector.shape_cast %18 : vector<1x8x256xf32> to vector<8x256xf32>
    %20 = tpu.iota {dimensions = array<i32: 0>} : vector<8x256xi32>
    %c0_i32 = arith.constant 0 : i32
    %21 = vector.broadcast %c0_i32 : i32 to vector<8x256xi32>
    %22 = arith.cmpi eq, %20, %21 : vector<8x256xi32>
    %23 = arith.extui %22 : vector<8x256xi1> to vector<8x256xi32>
    %24 = arith.sitofp %23 : vector<8x256xi32> to vector<8x256xf32>
    %c0_24 = arith.constant 0 : index
    %c0_25 = arith.constant 0 : index
    %c0_26 = arith.constant 0 : index
    %25 = vector.load %arg1[%c0_24, %c0_25, %c0_26] : memref<1x8x256xf32, #tpu.memory_space<vmem>>, vector<1x8x256xf32>
    %26 = vector.shape_cast %25 : vector<1x8x256xf32> to vector<8x256xf32>
    %27 = vector.shape_cast %26 : vector<8x256xf32> to vector<1x8x256xf32>
    %cst = arith.constant dense<0.000000e+00> : vector<1xf32>
    %28 = vector.multi_reduction <add>, %27, %cst [1, 2] : vector<1x8x256xf32> to vector<1xf32>
    %29 = vector.shape_cast %28 : vector<1xf32> to vector<1x1x1xf32>
    %30 = vector.extract %29[0, 0, 0] : f32 from vector<1x1x1xf32>
    %31 = arith.mulf %26, %26 : vector<8x256xf32>
    %32 = vector.shape_cast %31 : vector<8x256xf32> to vector<1x8x256xf32>
    %cst_27 = arith.constant dense<0.000000e+00> : vector<1xf32>
    %33 = vector.multi_reduction <add>, %32, %cst_27 [1, 2] : vector<1x8x256xf32> to vector<1xf32>
    %34 = vector.shape_cast %33 : vector<1xf32> to vector<1x1x1xf32>
    %35 = vector.extract %34[0, 0, 0] : f32 from vector<1x1x1xf32>
    %cst_28 = arith.constant 1.024000e+03 : f32
    %36 = arith.divf %30, %cst_28 : f32
    %cst_29 = arith.constant 1.024000e+03 : f32
    %37 = arith.divf %35, %cst_29 : f32
    %38 = arith.mulf %36, %36 : f32
    %39 = arith.subf %37, %38 : f32
    %cst_30 = arith.constant 9.99999974E-6 : f32
    %40 = arith.addf %39, %cst_30 : f32
    %41 = math.rsqrt %40 : f32
    %42 = vector.broadcast %36 : f32 to vector<8x256xf32>
    %43 = arith.subf %26, %42 : vector<8x256xf32>
    %44 = vector.broadcast %41 : f32 to vector<8x256xf32>
    %45 = arith.mulf %43, %44 : vector<8x256xf32>
    %46 = arith.mulf %45, %0 : vector<8x256xf32>
    %47 = arith.addf %46, %1 : vector<8x256xf32>
    %c17_i32 = arith.constant 17 : i32
    %48 = tpu.dynamic_rotate %47 by %c17_i32 dim 1 : vector<8x256xf32>, i32 -> vector<8x256xf32>
    %49 = arith.mulf %48, %5 : vector<8x256xf32>
    %c0_31 = arith.constant 0 : index
    %c0_32 = arith.constant 0 : index
    %50 = vector.load %arg8[%c0_31, %c0_32] : memref<80x256xf32, #tpu.memory_space<vmem>>, vector<8x256xf32>
    tpu.vector_store %arg8[%c0_31, %c0_32], %49 {strides = array<i32>} : memref<80x256xf32, #tpu.memory_space<vmem>>, vector<8x256xf32>,
    %c16_i32 = arith.constant 16 : i32
    %51 = tpu.dynamic_rotate %47 by %c16_i32 dim 1 : vector<8x256xf32>, i32 -> vector<8x256xf32>
    %52 = arith.mulf %51, %7 : vector<8x256xf32>
    %c8_33 = arith.constant 8 : index
    %c0_34 = arith.constant 0 : index
    %53 = vector.load %arg8[%c8_33, %c0_34] : memref<80x256xf32, #tpu.memory_space<vmem>>, vector<8x256xf32>
    tpu.vector_store %arg8[%c8_33, %c0_34], %52 {strides = array<i32>} : memref<80x256xf32, #tpu.memory_space<vmem>>, vector<8x256xf32>,
    %c15_i32 = arith.constant 15 : i32
    %54 = tpu.dynamic_rotate %47 by %c15_i32 dim 1 : vector<8x256xf32>, i32 -> vector<8x256xf32>
    %55 = arith.mulf %54, %9 : vector<8x256xf32>
    %c16 = arith.constant 16 : index
    %c0_35 = arith.constant 0 : index
    %56 = vector.load %arg8[%c16, %c0_35] : memref<80x256xf32, #tpu.memory_space<vmem>>, vector<8x256xf32>
    tpu.vector_store %arg8[%c16, %c0_35], %55 {strides = array<i32>} : memref<80x256xf32, #tpu.memory_space<vmem>>, vector<8x256xf32>,
    %c1_i32 = arith.constant 1 : i32
    %57 = tpu.dynamic_rotate %47 by %c1_i32 dim 1 : vector<8x256xf32>, i32 -> vector<8x256xf32>
    %58 = arith.mulf %57, %11 : vector<8x256xf32>
    %c24 = arith.constant 24 : index
    %c0_36 = arith.constant 0 : index
    %59 = vector.load %arg8[%c24, %c0_36] : memref<80x256xf32, #tpu.memory_space<vmem>>, vector<8x256xf32>
    tpu.vector_store %arg8[%c24, %c0_36], %58 {strides = array<i32>} : memref<80x256xf32, #tpu.memory_space<vmem>>, vector<8x256xf32>,
    %c32 = arith.constant 32 : index
    %c0_37 = arith.constant 0 : index
    %60 = vector.load %arg8[%c32, %c0_37] : memref<80x256xf32, #tpu.memory_space<vmem>>, vector<8x256xf32>
    tpu.vector_store %arg8[%c32, %c0_37], %47 {strides = array<i32>} : memref<80x256xf32, #tpu.memory_space<vmem>>, vector<8x256xf32>,
    %c255_i32 = arith.constant 255 : i32
    %61 = tpu.dynamic_rotate %47 by %c255_i32 dim 1 : vector<8x256xf32>, i32 -> vector<8x256xf32>
    %62 = arith.mulf %61, %13 : vector<8x256xf32>
    %c40 = arith.constant 40 : index
    %c0_38 = arith.constant 0 : index
    %63 = vector.load %arg8[%c40, %c0_38] : memref<80x256xf32, #tpu.memory_space<vmem>>, vector<8x256xf32>
    tpu.vector_store %arg8[%c40, %c0_38], %62 {strides = array<i32>} : memref<80x256xf32, #tpu.memory_space<vmem>>, vector<8x256xf32>,
    %c241_i32 = arith.constant 241 : i32
    %64 = tpu.dynamic_rotate %47 by %c241_i32 dim 1 : vector<8x256xf32>, i32 -> vector<8x256xf32>
    %65 = arith.mulf %64, %15 : vector<8x256xf32>
    %c48 = arith.constant 48 : index
    %c0_39 = arith.constant 0 : index
    %66 = vector.load %arg8[%c48, %c0_39] : memref<80x256xf32, #tpu.memory_space<vmem>>, vector<8x256xf32>
    tpu.vector_store %arg8[%c48, %c0_39], %65 {strides = array<i32>} : memref<80x256xf32, #tpu.memory_space<vmem>>, vector<8x256xf32>,
    %c240_i32 = arith.constant 240 : i32
    %67 = tpu.dynamic_rotate %47 by %c240_i32 dim 1 : vector<8x256xf32>, i32 -> vector<8x256xf32>
    %68 = arith.mulf %67, %17 : vector<8x256xf32>
    %c56 = arith.constant 56 : index
    %c0_40 = arith.constant 0 : index
    %69 = vector.load %arg8[%c56, %c0_40] : memref<80x256xf32, #tpu.memory_space<vmem>>, vector<8x256xf32>
    tpu.vector_store %arg8[%c56, %c0_40], %68 {strides = array<i32>} : memref<80x256xf32, #tpu.memory_space<vmem>>, vector<8x256xf32>,
    %c239_i32 = arith.constant 239 : i32
    %70 = tpu.dynamic_rotate %47 by %c239_i32 dim 1 : vector<8x256xf32>, i32 -> vector<8x256xf32>
    %71 = arith.mulf %70, %19 : vector<8x256xf32>
    %c64 = arith.constant 64 : index
    %c0_41 = arith.constant 0 : index
    %72 = vector.load %arg8[%c64, %c0_41] : memref<80x256xf32, #tpu.memory_space<vmem>>, vector<8x256xf32>
    tpu.vector_store %arg8[%c64, %c0_41], %71 {strides = array<i32>} : memref<80x256xf32, #tpu.memory_space<vmem>>, vector<8x256xf32>,
    %c72 = arith.constant 72 : index
    %c0_42 = arith.constant 0 : index
    %73 = vector.load %arg8[%c72, %c0_42] : memref<80x256xf32, #tpu.memory_space<vmem>>, vector<8x256xf32>
    tpu.vector_store %arg8[%c72, %c0_42], %24 {strides = array<i32>} : memref<80x256xf32, #tpu.memory_space<vmem>>, vector<8x256xf32>,
    %c0_43 = arith.constant 0 : index
    %c0_44 = arith.constant 0 : index
    %74 = vector.load %arg8[%c0_43, %c0_44] : memref<80x256xf32, #tpu.memory_space<vmem>>, vector<80x256xf32>
    %cst_45 = arith.constant dense<0.000000e+00> : vector<8x256xf32>
    %75 = tpu.matmul %2, %74, %cst_45 {dimension_numbers = #tpu.dot_dimension_numbers<[1], [0], [0], [1], [0, 0, 1, 1], [], []>} : vector<8x80xf32>, vector<80x256xf32>, vector<8x256xf32> -> vector<8x256xf32>
    %76 = arith.negf %75 : vector<8x256xf32>
    %77 = math.exp %76 : vector<8x256xf32>
    %cst_46 = arith.constant 1.000000e+00 : f32
    %78 = vector.broadcast %cst_46 : f32 to vector<8x256xf32>
    %79 = arith.addf %78, %77 : vector<8x256xf32>
    %80 = arith.divf %78, %79 : vector<8x256xf32>
    %81 = arith.mulf %75, %80 : vector<8x256xf32>
    %c17_i32_47 = arith.constant 17 : i32
    %82 = tpu.dynamic_rotate %81 by %c17_i32_47 dim 1 : vector<8x256xf32>, i32 -> vector<8x256xf32>
    %83 = arith.mulf %82, %5 : vector<8x256xf32>
    %c0_48 = arith.constant 0 : index
    %c0_49 = arith.constant 0 : index
    %84 = vector.load %arg8[%c0_48, %c0_49] : memref<80x256xf32, #tpu.memory_space<vmem>>, vector<8x256xf32>
    tpu.vector_store %arg8[%c0_48, %c0_49], %83 {strides = array<i32>} : memref<80x256xf32, #tpu.memory_space<vmem>>, vector<8x256xf32>,
    %c16_i32_50 = arith.constant 16 : i32
    %85 = tpu.dynamic_rotate %81 by %c16_i32_50 dim 1 : vector<8x256xf32>, i32 -> vector<8x256xf32>
    %86 = arith.mulf %85, %7 : vector<8x256xf32>
    %c8_51 = arith.constant 8 : index
    %c0_52 = arith.constant 0 : index
    %87 = vector.load %arg8[%c8_51, %c0_52] : memref<80x256xf32, #tpu.memory_space<vmem>>, vector<8x256xf32>
    tpu.vector_store %arg8[%c8_51, %c0_52], %86 {strides = array<i32>} : memref<80x256xf32, #tpu.memory_space<vmem>>, vector<8x256xf32>,
    %c15_i32_53 = arith.constant 15 : i32
    %88 = tpu.dynamic_rotate %81 by %c15_i32_53 dim 1 : vector<8x256xf32>, i32 -> vector<8x256xf32>
    %89 = arith.mulf %88, %9 : vector<8x256xf32>
    %c16_54 = arith.constant 16 : index
    %c0_55 = arith.constant 0 : index
    %90 = vector.load %arg8[%c16_54, %c0_55] : memref<80x256xf32, #tpu.memory_space<vmem>>, vector<8x256xf32>
    tpu.vector_store %arg8[%c16_54, %c0_55], %89 {strides = array<i32>} : memref<80x256xf32, #tpu.memory_space<vmem>>, vector<8x256xf32>,
    %c1_i32_56 = arith.constant 1 : i32
    %91 = tpu.dynamic_rotate %81 by %c1_i32_56 dim 1 : vector<8x256xf32>, i32 -> vector<8x256xf32>
    %92 = arith.mulf %91, %11 : vector<8x256xf32>
    %c24_57 = arith.constant 24 : index
    %c0_58 = arith.constant 0 : index
    %93 = vector.load %arg8[%c24_57, %c0_58] : memref<80x256xf32, #tpu.memory_space<vmem>>, vector<8x256xf32>
    tpu.vector_store %arg8[%c24_57, %c0_58], %92 {strides = array<i32>} : memref<80x256xf32, #tpu.memory_space<vmem>>, vector<8x256xf32>,
    %c32_59 = arith.constant 32 : index
    %c0_60 = arith.constant 0 : index
    %94 = vector.load %arg8[%c32_59, %c0_60] : memref<80x256xf32, #tpu.memory_space<vmem>>, vector<8x256xf32>
    tpu.vector_store %arg8[%c32_59, %c0_60], %81 {strides = array<i32>} : memref<80x256xf32, #tpu.memory_space<vmem>>, vector<8x256xf32>,
    %c255_i32_61 = arith.constant 255 : i32
    %95 = tpu.dynamic_rotate %81 by %c255_i32_61 dim 1 : vector<8x256xf32>, i32 -> vector<8x256xf32>
    %96 = arith.mulf %95, %13 : vector<8x256xf32>
    %c40_62 = arith.constant 40 : index
    %c0_63 = arith.constant 0 : index
    %97 = vector.load %arg8[%c40_62, %c0_63] : memref<80x256xf32, #tpu.memory_space<vmem>>, vector<8x256xf32>
    tpu.vector_store %arg8[%c40_62, %c0_63], %96 {strides = array<i32>} : memref<80x256xf32, #tpu.memory_space<vmem>>, vector<8x256xf32>,
    %c241_i32_64 = arith.constant 241 : i32
    %98 = tpu.dynamic_rotate %81 by %c241_i32_64 dim 1 : vector<8x256xf32>, i32 -> vector<8x256xf32>
    %99 = arith.mulf %98, %15 : vector<8x256xf32>
    %c48_65 = arith.constant 48 : index
    %c0_66 = arith.constant 0 : index
    %100 = vector.load %arg8[%c48_65, %c0_66] : memref<80x256xf32, #tpu.memory_space<vmem>>, vector<8x256xf32>
    tpu.vector_store %arg8[%c48_65, %c0_66], %99 {strides = array<i32>} : memref<80x256xf32, #tpu.memory_space<vmem>>, vector<8x256xf32>,
    %c240_i32_67 = arith.constant 240 : i32
    %101 = tpu.dynamic_rotate %81 by %c240_i32_67 dim 1 : vector<8x256xf32>, i32 -> vector<8x256xf32>
    %102 = arith.mulf %101, %17 : vector<8x256xf32>
    %c56_68 = arith.constant 56 : index
    %c0_69 = arith.constant 0 : index
    %103 = vector.load %arg8[%c56_68, %c0_69] : memref<80x256xf32, #tpu.memory_space<vmem>>, vector<8x256xf32>
    tpu.vector_store %arg8[%c56_68, %c0_69], %102 {strides = array<i32>} : memref<80x256xf32, #tpu.memory_space<vmem>>, vector<8x256xf32>,
    %c239_i32_70 = arith.constant 239 : i32
    %104 = tpu.dynamic_rotate %81 by %c239_i32_70 dim 1 : vector<8x256xf32>, i32 -> vector<8x256xf32>
    %105 = arith.mulf %104, %19 : vector<8x256xf32>
    %c64_71 = arith.constant 64 : index
    %c0_72 = arith.constant 0 : index
    %106 = vector.load %arg8[%c64_71, %c0_72] : memref<80x256xf32, #tpu.memory_space<vmem>>, vector<8x256xf32>
    tpu.vector_store %arg8[%c64_71, %c0_72], %105 {strides = array<i32>} : memref<80x256xf32, #tpu.memory_space<vmem>>, vector<8x256xf32>,
    %c72_73 = arith.constant 72 : index
    %c0_74 = arith.constant 0 : index
    %107 = vector.load %arg8[%c72_73, %c0_74] : memref<80x256xf32, #tpu.memory_space<vmem>>, vector<8x256xf32>
    tpu.vector_store %arg8[%c72_73, %c0_74], %24 {strides = array<i32>} : memref<80x256xf32, #tpu.memory_space<vmem>>, vector<8x256xf32>,
    %c0_75 = arith.constant 0 : index
    %c0_76 = arith.constant 0 : index
    %108 = vector.load %arg8[%c0_75, %c0_76] : memref<80x256xf32, #tpu.memory_space<vmem>>, vector<80x256xf32>
    %cst_77 = arith.constant dense<0.000000e+00> : vector<8x256xf32>
    %109 = tpu.matmul %3, %108, %cst_77 {dimension_numbers = #tpu.dot_dimension_numbers<[1], [0], [0], [1], [0, 0, 1, 1], [], []>} : vector<8x80xf32>, vector<80x256xf32>, vector<8x256xf32> -> vector<8x256xf32>
    %110 = arith.negf %109 : vector<8x256xf32>
    %111 = math.exp %110 : vector<8x256xf32>
    %cst_78 = arith.constant 1.000000e+00 : f32
    %112 = vector.broadcast %cst_78 : f32 to vector<8x256xf32>
    %113 = arith.addf %112, %111 : vector<8x256xf32>
    %114 = arith.divf %112, %113 : vector<8x256xf32>
    %115 = arith.mulf %109, %114 : vector<8x256xf32>
    %c0_79 = arith.constant 0 : index
    %c0_80 = arith.constant 0 : index
    %c0_81 = arith.constant 0 : index
    %116 = vector.load %arg7[%c0_79, %c0_80, %c0_81] : memref<1x8x256xf32, #tpu.memory_space<vmem>>, vector<1x8x256xf32>
    %117 = vector.shape_cast %116 : vector<1x8x256xf32> to vector<8x256xf32>
    %118 = vector.shape_cast %115 : vector<8x256xf32> to vector<1x8x256xf32>
    tpu.vector_store %arg7[%c0_79, %c0_80, %c0_81], %118 {strides = array<i32>} : memref<1x8x256xf32, #tpu.memory_space<vmem>>, vector<1x8x256xf32>,
    return
  }
  func.func @transform_0(%arg0: i32) -> (i32, i32, i32) {
    %c0_i32 = arith.constant 0 : i32
    %c0_i32_0 = arith.constant 0 : i32
    %c0_i32_1 = arith.constant 0 : i32
    return %arg0, %c0_i32, %c0_i32_0 : i32, i32, i32
  }
  func.func @transform_1(%arg0: i32) -> (i32, i32) {
    %c0_i32 = arith.constant 0 : i32
    %c0_i32_0 = arith.constant 0 : i32
    %c0_i32_1 = arith.constant 0 : i32
    return %c0_i32, %c0_i32_0 : i32, i32
  }
  func.func @transform_2(%arg0: i32) -> (i32, i32) {
    %c0_i32 = arith.constant 0 : i32
    %c0_i32_0 = arith.constant 0 : i32
    %c0_i32_1 = arith.constant 0 : i32
    return %c0_i32, %c0_i32_0 : i32, i32
  }
  func.func @transform_3(%arg0: i32) -> (i32, i32, i32) {
    %c0_i32 = arith.constant 0 : i32
    %c0_i32_0 = arith.constant 0 : i32
    %c0_i32_1 = arith.constant 0 : i32
    %c0_i32_2 = arith.constant 0 : i32
    return %c0_i32, %c0_i32_0, %c0_i32_1 : i32, i32, i32
  }
  func.func @transform_4(%arg0: i32) -> (i32, i32) {
    %c0_i32 = arith.constant 0 : i32
    %c0_i32_0 = arith.constant 0 : i32
    %c0_i32_1 = arith.constant 0 : i32
    return %c0_i32, %c0_i32_0 : i32, i32
  }
  func.func @transform_5(%arg0: i32) -> (i32, i32) {
    %c0_i32 = arith.constant 0 : i32
    %c0_i32_0 = arith.constant 0 : i32
    %c0_i32_1 = arith.constant 0 : i32
    return %c0_i32, %c0_i32_0 : i32, i32
  }
  func.func @transform_6(%arg0: i32) -> (i32, i32, i32) {
    %c0_i32 = arith.constant 0 : i32
    %c0_i32_0 = arith.constant 0 : i32
    %c0_i32_1 = arith.constant 0 : i32
    return %arg0, %c0_i32, %c0_i32_0 : i32, i32, i32
  }
}

</mosaic_0001>

<llo_original>
// kernel: tpu_custom_call.1
$region0: #{tpu_custom_call.1}
  #allocation0 [shape = 'u32[]', space=smem, size = 0x4, offset = 0x4, fixed_abs, tag = 'smem constant byte address 0x4 - core index']
  #allocation1 [shape = 'u32[144,128]{1,0:T(1,128)}', space=vmem, size = 0x12000, scoped, tag = 'internal scratch']
  #allocation2 [shape = 'f32[80,256]{1,0:T(8,128)}', space=vmem, size = 0x14000, scoped, tag = 'scratch operand']
  %s0 = inlined_call_operand.hbm [shape: f32[2,8,256], index: 0, kind: input, shape index: {}]
  %s1 = inlined_call_operand.hbm [shape: f32[8,256], index: 1, kind: input, shape index: {}]
  %s2 = inlined_call_operand.hbm [shape: f32[8,256], index: 2, kind: input, shape index: {}]
  %s3 = inlined_call_operand.hbm [shape: f32[9,8,256], index: 3, kind: input, shape index: {}]
  %s4 = inlined_call_operand.hbm [shape: f32[8,80], index: 4, kind: input, shape index: {}]
  %s5 = inlined_call_operand.vmem [shape: f32[8,80], index: 5, kind: input, shape index: {}]
  %s6 = inlined_call_operand.hbm [shape: f32[2,8,256], index: 6, kind: output, shape index: {}]
  %s7 = sld [smem:[#allocation0]]
  $region77: #{tpu_custom_call.1} parent=0
    _
  %s9 = ssub.s32 1, %s7
  %s10 = scalar_select 0, %s9, %s7
  $region1: #{tpu_custom_call.1} parent=0
    #allocation3 [shape = 'u8[16384]{0}', space=vmem, size = 0x4000, scoped, tag = 'input window, operand 0']
    #allocation4 [shape = 's32[2]{0}', space=sflag, size = 0x8, scoped, tag = 'scoped memory for tpu_custom_call.1']
    #allocation5 [shape = 's32[2]{0}', space=sflag, size = 0x8, scoped, tag = 'scoped memory for tpu_custom_call.1']
    #allocation6 [shape = 'u8[8192]{0}', space=vmem, size = 0x2000, scoped, tag = 'input window, operand 1, single buffered']
    #allocation7 [shape = 's32[1]{0}', space=sflag, size = 0x4, scoped, tag = 'scoped memory for tpu_custom_call.1']
    #allocation8 [shape = 'u8[8192]{0}', space=vmem, size = 0x2000, scoped, tag = 'input window, operand 2, single buffered']
    #allocation9 [shape = 'u8[73728]{0}', space=vmem, size = 0x12000, scoped, tag = 'input window, operand 3, single buffered']
    #allocation10 [shape = 's32[1]{0}', space=sflag, size = 0x4, scoped, tag = 'scoped memory for tpu_custom_call.1']
    #allocation11 [shape = 'u8[4096]{0}', space=vmem, size = 0x1000, scoped, tag = 'input window, operand 4, single buffered']
    #allocation12 [shape = 'u8[16384]{0}', space=vmem, size = 0x4000, scoped, tag = 'output window, operand 0']
    %11 = vsyncpa [#allocation4], 0
    %s12 = scalar_lea.sflag [#allocation4], 1
    %13 = vsyncpa %s12, 0
    %14 = vsyncpa [#allocation7], 0
    %15 = vsyncpa [#allocation10], 0
    %16 = vsyncpa [#allocation5], 0
    %s17 = scalar_lea.sflag [#allocation5], 1
    %18 = vsyncpa %s17, 0
    loop: start=0, step=1, limit=4
    $region2: #{tpu_custom_call.1} parent=1 // loop_pre_header
      _
    $region3: #{tpu_custom_call.1} parent=1 // loop_header
      %s20 = sphi 0, %s24
      %p21 = scmp.ge.s32.totalorder %s20, 4
      %s30 = sphi 0, %s32
      %s33 = sphi 0, %s30
      %s34 = sphi 0, %s33
      %s50 = sphi 0, %s34
      %s54 = sphi 0, %s54
      %s56 = sphi 0, %s54
      %s57 = sphi 0, %s56
      %s71 = sphi 0, %s57
      %s75 = sphi 0, %s75
      %s77 = sphi 0, %s75
      %s78 = sphi 0, %s77
      %s92 = sphi 0, %s78
      %s96 = sphi 0, %s96
      %s98 = sphi 0, %s96
      %s99 = sphi 0, %s98
      %s113 = sphi 0, %s99
      %s117 = sphi 0, %s117
      %s119 = sphi 0, %s117
      %s120 = sphi 0, %s119
      %s134 = sphi 0, %s120
      %s138 = sphi 0, %s138
      %s140 = sphi 0, %s138
      %s141 = sphi 0, %s140
      %s155 = sphi 0, %s141
      %s161 = sphi 0, %s163
      %s164 = sphi 0, %s161
      %s165 = sphi 0, %s164
      %s181 = sphi 0, %s165
    $region4: #{tpu_custom_call.1} parent=1 // loop_header_branch
      %23 = sbr.rel (%p21) target = $region8
    $region5: #{tpu_custom_call.1} parent=1 // loop_body
      %s25 = ssub.s32 %s20, 1
      %s26 = ssub.s32 %s20, 2
      %s27 = sadd.s32 %s20, 1
      %s28 = ssub.s32 %s20, %s27
      %p29 = scmp.eq.s32.totalorder %s28, 0
      %s31 = sadd.s32 %s30, 1
      %s32 = scalar_select %p29, %s30, %s31
      %p35 = pneg %p29
      %p36 = scmp.eq.s32.totalorder %s20, 1
      %p37 = por %p35, %p36
      %p38 = scmp.ne.s32.totalorder %s30, %s33
      %p39 = scmp.eq.s32.totalorder %s20, 0
      %p40 = por %p38, %p39
      %p41 = scmp.ne.s32.totalorder %s30, %s33
      %p42 = scmp.eq.s32.totalorder %s25, 1
      %p43 = por %p41, %p42
      %p44 = scmp.ne.s32.totalorder %s33, %s34
      %p45 = scmp.eq.s32.totalorder %s25, 0
      %p46 = por %p44, %p45
      %p47 = scmp.ne.s32.totalorder %s33, %s34
      %p48 = scmp.eq.s32.totalorder %s26, 1
      %p49 = por %p47, %p48
      %p51 = scmp.ne.s32.totalorder %s34, %s50
      %p52 = scmp.eq.s32.totalorder %s26, 0
      %p53 = por %p51, %p52
      %s55 = sadd.s32 %s54, 1
      %p58 = scmp.eq.s32.totalorder %s20, 1
      %p59 = scmp.ne.s32.totalorder %s54, %s56
      %p60 = scmp.eq.s32.totalorder %s20, 0
      %p61 = por %p59, %p60
      %p62 = scmp.ne.s32.totalorder %s54, %s56
      %p63 = scmp.eq.s32.totalorder %s25, 1
      %p64 = por %p62, %p63
      %p65 = scmp.ne.s32.totalorder %s56, %s57
      %p66 = scmp.eq.s32.totalorder %s25, 0
      %p67 = por %p65, %p66
      %p68 = scmp.ne.s32.totalorder %s56, %s57
      %p69 = scmp.eq.s32.totalorder %s26, 1
      %p70 = por %p68, %p69
      %p72 = scmp.ne.s32.totalorder %s57, %s71
      %p73 = scmp.eq.s32.totalorder %s26, 0
      %p74 = por %p72, %p73
      %s76 = sadd.s32 %s75, 1
      %p79 = scmp.eq.s32.totalorder %s20, 1
      %p80 = scmp.ne.s32.totalorder %s75, %s77
      %p81 = scmp.eq.s32.totalorder %s20, 0
      %p82 = por %p80, %p81
      %p83 = scmp.ne.s32.totalorder %s75, %s77
      %p84 = scmp.eq.s32.totalorder %s25, 1
      %p85 = por %p83, %p84
      %p86 = scmp.ne.s32.totalorder %s77, %s78
      %p87 = scmp.eq.s32.totalorder %s25, 0
      %p88 = por %p86, %p87
      %p89 = scmp.ne.s32.totalorder %s77, %s78
      %p90 = scmp.eq.s32.totalorder %s26, 1
      %p91 = por %p89, %p90
      %p93 = scmp.ne.s32.totalorder %s78, %s92
      %p94 = scmp.eq.s32.totalorder %s26, 0
      %p95 = por %p93, %p94
      %s97 = sadd.s32 %s96, 1
      %p100 = scmp.eq.s32.totalorder %s20, 1
      %p101 = scmp.ne.s32.totalorder %s96, %s98
      %p102 = scmp.eq.s32.totalorder %s20, 0
      %p103 = por %p101, %p102
      %p104 = scmp.ne.s32.totalorder %s96, %s98
      %p105 = scmp.eq.s32.totalorder %s25, 1
      %p106 = por %p104, %p105
      %p107 = scmp.ne.s32.totalorder %s98, %s99
      %p108 = scmp.eq.s32.totalorder %s25, 0
      %p109 = por %p107, %p108
      %p110 = scmp.ne.s32.totalorder %s98, %s99
      %p111 = scmp.eq.s32.totalorder %s26, 1
      %p112 = por %p110, %p111
      %p114 = scmp.ne.s32.totalorder %s99, %s113
      %p115 = scmp.eq.s32.totalorder %s26, 0
      %p116 = por %p114, %p115
      %s118 = sadd.s32 %s117, 1
      %p121 = scmp.eq.s32.totalorder %s20, 1
      %p122 = scmp.ne.s32.totalorder %s117, %s119
      %p123 = scmp.eq.s32.totalorder %s20, 0
      %p124 = por %p122, %p123
      %p125 = scmp.ne.s32.totalorder %s117, %s119
      %p126 = scmp.eq.s32.totalorder %s25, 1
      %p127 = por %p125, %p126
      %p128 = scmp.ne.s32.totalorder %s119, %s120
      %p129 = scmp.eq.s32.totalorder %s25, 0
      %p130 = por %p128, %p129
      %p131 = scmp.ne.s32.totalorder %s119, %s120
      %p132 = scmp.eq.s32.totalorder %s26, 1
      %p133 = por %p131, %p132
      %p135 = scmp.ne.s32.totalorder %s120, %s134
      %p136 = scmp.eq.s32.totalorder %s26, 0
      %p137 = por %p135, %p136
      %s139 = sadd.s32 %s138, 1
      %p142 = scmp.eq.s32.totalorder %s20, 1
      %p143 = scmp.ne.s32.totalorder %s138, %s140
      %p144 = scmp.eq.s32.totalorder %s20, 0
      %p145 = por %p143, %p144
      %p146 = scmp.ne.s32.totalorder %s138, %s140
      %p147 = scmp.eq.s32.totalorder %s25, 1
      %p148 = por %p146, %p147
      %p149 = scmp.ne.s32.totalorder %s140, %s141
      %p150 = scmp.eq.s32.totalorder %s25, 0
      %p151 = por %p149, %p150
      %p152 = scmp.ne.s32.totalorder %s140, %s141
      %p153 = scmp.eq.s32.totalorder %s26, 1
      %p154 = por %p152, %p153
      %p156 = scmp.ne.s32.totalorder %s141, %s155
      %p157 = scmp.eq.s32.totalorder %s26, 0
      %p158 = por %p156, %p157
      %s159 = ssub.s32 %s20, %s27
      %p160 = scmp.eq.s32.totalorder %s159, 0
      %s162 = sadd.s32 %s161, 1
      %s163 = scalar_select %p160, %s161, %s162
      %p166 = pneg %p160
      %p167 = scmp.eq.s32.totalorder %s20, 1
      %p168 = por %p166, %p167
      %p169 = scmp.ne.s32.totalorder %s161, %s164
      %p170 = scmp.eq.s32.totalorder %s20, 0
      %p171 = por %p169, %p170
      %p172 = scmp.ne.s32.totalorder %s161, %s164
      %p173 = scmp.eq.s32.totalorder %s25, 1
      %p174 = por %p172, %p173
      %p175 = scmp.ne.s32.totalorder %s164, %s165
      %p176 = scmp.eq.s32.totalorder %s25, 0
      %p177 = por %p175, %p176
      %p178 = scmp.ne.s32.totalorder %s164, %s165
      %p179 = scmp.eq.s32.totalorder %s26, 1
      %p180 = por %p178, %p179
      %p182 = scmp.ne.s32.totalorder %s165, %s181
      %p183 = scmp.eq.s32.totalorder %s26, 0
      %p184 = por %p182, %p183
      %p185 = scmp.le.s32.totalorder 1, %s20
      %p186 = scmp.lt.s32.totalorder %s20, 3
      %p187 = pnand %p185, %p186
      %p188 = pneg %p187
      // Predicated region
      $region9: #{tpu_custom_call.1} parent=5 // pred_check
        _
      $region10: #{tpu_custom_call.1} parent=5 // pred_check_branch
        %190 = sbr.rel (%p187) target = $region12
      $region11: #{tpu_custom_call.1} parent=5 // pred_region
        %s191 = ssub.s32 %s20, 1
        // Predicated region
        $region13: #{tpu_custom_call.1} parent=11 // pred_check
          %p192 = pneg %p67
        $region14: #{tpu_custom_call.1} parent=11 // pred_check_branch
          %194 = sbr.rel (%p192) target = $region16
        $region15: #{tpu_custom_call.1} parent=11 // pred_region
          %s196 = ssub.s32 256, 256
          %197 = vsyncadd [#allocation7], %s196
          %s199 = sshll.u32 [#allocation6], 4
          %s200 = int_to_ptr.vmem [resolvable:$true] %s199
          %202 = dma.hbm_to_vmem [thread:$0]  %s1, 256, %s200, [#allocation7]
        $region16: #{tpu_custom_call.1} parent=11 // pred_fallthru
          _
        // Predicated region
        $region17: #{tpu_custom_call.1} parent=11 // pred_check
          %p203 = pneg %p88
        $region18: #{tpu_custom_call.1} parent=11 // pred_check_branch
          %205 = sbr.rel (%p203) target = $region20
        $region19: #{tpu_custom_call.1} parent=11 // pred_region
          %s207 = ssub.s32 256, 256
          %208 = vsyncadd [#allocation7], %s207
          %s210 = sshll.u32 [#allocation8], 4
          %s211 = int_to_ptr.vmem [resolvable:$true] %s210
          %213 = dma.hbm_to_vmem [thread:$0]  %s2, 256, %s211, [#allocation7]
        $region20: #{tpu_custom_call.1} parent=11 // pred_fallthru
          _
        // Predicated region
        $region21: #{tpu_custom_call.1} parent=11 // pred_check
          %p214 = pneg %p109
        $region22: #{tpu_custom_call.1} parent=11 // pred_check_branch
          %216 = sbr.rel (%p214) target = $region24
        $region23: #{tpu_custom_call.1} parent=11 // pred_region
          %s218 = ssub.s32 2304, 2304
          %219 = vsyncadd [#allocation10], %s218
          %s220 = sshll.u32 [#allocation9], 4
          %s221 = int_to_ptr.vmem [resolvable:$true] %s220
          %226 = dma.hbm_to_vmem [thread:$0]  %s3, 2304, %s221, [#allocation10], 256, 256, 16
        $region24: #{tpu_custom_call.1} parent=11 // pred_fallthru
          _
        // Predicated region
        $region25: #{tpu_custom_call.1} parent=11 // pred_check
          %p227 = pneg %p130
        $region26: #{tpu_custom_call.1} parent=11 // pred_check_branch
          %229 = sbr.rel (%p227) target = $region28
        $region27: #{tpu_custom_call.1} parent=11 // pred_region
          %s231 = ssub.s32 128, 128
          %232 = vsyncadd [#allocation10], %s231
          %s234 = sshll.u32 [#allocation11], 4
          %s235 = int_to_ptr.vmem [resolvable:$true] %s234
          %237 = dma.hbm_to_vmem [thread:$0]  %s4, 128, %s235, [#allocation10]
        $region28: #{tpu_custom_call.1} parent=11 // pred_fallthru
          _
        // Predicated region
        $region29: #{tpu_custom_call.1} parent=11 // pred_check
          %p238 = pneg %p151
        $region30: #{tpu_custom_call.1} parent=11 // pred_check_branch
          %240 = sbr.rel (%p238) target = $region32
        $region31: #{tpu_custom_call.1} parent=11 // pred_region
          _
        $region32: #{tpu_custom_call.1} parent=11 // pred_fallthru
          _
      $region12: #{tpu_custom_call.1} parent=5 // pred_fallthru
        _
      %p241 = scmp.lt.s32.totalorder %s20, 2
      // Predicated region
      $region33: #{tpu_custom_call.1} parent=5 // pred_check
        %p242 = pneg %p241
      $region34: #{tpu_custom_call.1} parent=5 // pred_check_branch
        %244 = sbr.rel (%p242) target = $region36
      $region35: #{tpu_custom_call.1} parent=5 // pred_region
        // Predicated region
        $region37: #{tpu_custom_call.1} parent=35 // pred_check
          %p245 = pneg %p40
        $region38: #{tpu_custom_call.1} parent=35 // pred_check_branch
          %247 = sbr.rel (%p245) target = $region40
        $region39: #{tpu_custom_call.1} parent=35 // pred_region
          %s248 = sand.u32 %s30, 1
          %s249 = scalar_lea.sflag [#allocation4], %s248
          %s250 = sand.u32 %s30, 1
          %s251 = smul.addr %s250, 16
          %s252 = scalar_lea.vmem [#allocation3], %s251
          %s254 = ssub.s32 256, 256
          %255 = vsyncadd %s249, %s254
          %s256 = smul.addr %s20, 2
          %s257 = smul.addr %s256, 128
          %s258 = scalar_lea.hbm %s0, %s257
          %s260 = sshll.u32 %s252, 4
          %s261 = int_to_ptr.vmem [resolvable:$true] %s260
          %263 = dma.hbm_to_vmem [thread:$0]  %s258, 256, %s261, %s249
        $region40: #{tpu_custom_call.1} parent=35 // pred_fallthru
          _
      $region36: #{tpu_custom_call.1} parent=5 // pred_fallthru
        _
      %p264 = scmp.le.s32.totalorder 1, %s20
      %p265 = scmp.lt.s32.totalorder %s20, 3
      %p266 = pnand %p264, %p265
      %p267 = pneg %p266
      // Predicated region
      $region41: #{tpu_custom_call.1} parent=5 // pred_check
        _
      $region42: #{tpu_custom_call.1} parent=5 // pred_check_branch
        %269 = sbr.rel (%p266) target = $region44
      $region43: #{tpu_custom_call.1} parent=5 // pred_region
        %s270 = ssub.s32 %s20, 1
        %s271 = sand.u32 %s33, 1
        %s272 = scalar_lea.sflag [#allocation4], %s271
        %s273 = sand.u32 %s33, 1
        %s274 = smul.addr %s273, 16
        %s275 = scalar_lea.vmem [#allocation3], %s274
        // Predicated region
        $region45: #{tpu_custom_call.1} parent=43 // pred_check
          %p276 = pneg %p46
        $region46: #{tpu_custom_call.1} parent=43 // pred_check_branch
          %278 = sbr.rel (%p276) target = $region48
        $region47: #{tpu_custom_call.1} parent=43 // pred_region
          %279 = dma.done %s272, 256
        $region48: #{tpu_custom_call.1} parent=43 // pred_fallthru
          _
        // Predicated region
        $region49: #{tpu_custom_call.1} parent=43 // pred_check
          %p280 = pneg %p67
        $region50: #{tpu_custom_call.1} parent=43 // pred_check_branch
          %282 = sbr.rel (%p280) target = $region52
        $region51: #{tpu_custom_call.1} parent=43 // pred_region
          %283 = dma.done [#allocation7], 256
        $region52: #{tpu_custom_call.1} parent=43 // pred_fallthru
          _
        // Predicated region
        $region53: #{tpu_custom_call.1} parent=43 // pred_check
          %p284 = pneg %p88
        $region54: #{tpu_custom_call.1} parent=43 // pred_check_branch
          %286 = sbr.rel (%p284) target = $region56
        $region55: #{tpu_custom_call.1} parent=43 // pred_region
          %287 = dma.done [#allocation7], 256
        $region56: #{tpu_custom_call.1} parent=43 // pred_fallthru
          _
        // Predicated region
        $region57: #{tpu_custom_call.1} parent=43 // pred_check
          %p288 = pneg %p109
        $region58: #{tpu_custom_call.1} parent=43 // pred_check_branch
          %290 = sbr.rel (%p288) target = $region60
        $region59: #{tpu_custom_call.1} parent=43 // pred_region
          %291 = dma.done [#allocation10], 2304
        $region60: #{tpu_custom_call.1} parent=43 // pred_fallthru
          _
        // Predicated region
        $region61: #{tpu_custom_call.1} parent=43 // pred_check
          %p292 = pneg %p130
        $region62: #{tpu_custom_call.1} parent=43 // pred_check_branch
          %294 = sbr.rel (%p292) target = $region64
        $region63: #{tpu_custom_call.1} parent=43 // pred_region
          %295 = dma.done [#allocation10], 128
        $region64: #{tpu_custom_call.1} parent=43 // pred_fallthru
          _
        %s296 = sand.u32 %s33, 1
        %s297 = scalar_lea.sflag [#allocation4], %s296
        %s298 = sand.u32 %s33, 1
        %s299 = smul.addr %s298, 16
        %s300 = scalar_lea.vmem [#allocation3], %s299
        %p301 = pneg %p46
        %p302 = pneg %p43
        %p303 = pneg %p67
        %p304 = pneg %p64
        %p305 = pneg %p88
        %p306 = pneg %p85
        %p307 = pneg %p109
        %p308 = pneg %p106
        %p309 = pneg %p130
        %p310 = pneg %p127
        %p311 = pneg %p151
        %p312 = pneg %p148
        %p313 = pneg %p177
        %p314 = pneg %p174
        %s315 = sand.u32 %s164, 1
        %s316 = scalar_lea.sflag [#allocation5], %s315
        %s317 = sand.u32 %s164, 1
        %s318 = smul.addr %s317, 16
        %s319 = scalar_lea.vmem [#allocation12], %s318
        %v320 = vld [vmem:[#allocation6] sm:$0xff]
        %v321 = vld [vmem:[#allocation6 + $0x8] sm:$0xff]
        %v322 = vld [vmem:[#allocation8] sm:$0xff]
        %v323 = vld [vmem:[#allocation8 + $0x8] sm:$0xff]
        %v324 = vld [vmem:[#allocation11] sm:$0xff]
        %v325 = vld [vmem:[%s5] sm:$0xff]
        %v326 = vld [vmem:[#allocation9] sm:$0xff]
        %v327 = vld [vmem:[#allocation9 + $0x8] sm:$0xff]
        %s328 = scalar_lea.vmem [#allocation9], 16
        %v329 = vld [vmem:[%s328] sm:$0xff]
        %v330 = vld [vmem:[%s328 + $0x8] sm:$0xff]
        %s331 = scalar_lea.vmem [#allocation9], 32
        %v332 = vld [vmem:[%s331] sm:$0xff]
        %v333 = vld [vmem:[%s331 + $0x8] sm:$0xff]
        %s334 = scalar_lea.vmem [#allocation9], 48
        %v335 = vld [vmem:[%s334] sm:$0xff]
        %v336 = vld [vmem:[%s334 + $0x8] sm:$0xff]
        %s337 = scalar_lea.vmem [#allocation9], 80
        %v338 = vld [vmem:[%s337] sm:$0xff]
        %v339 = vld [vmem:[%s337 + $0x8] sm:$0xff]
        %s340 = scalar_lea.vmem [#allocation9], 96
        %v341 = vld [vmem:[%s340] sm:$0xff]
        %v342 = vld [vmem:[%s340 + $0x8] sm:$0xff]
        %s343 = scalar_lea.vmem [#allocation9], 112
        %v344 = vld [vmem:[%s343] sm:$0xff]
        %v345 = vld [vmem:[%s343 + $0x8] sm:$0xff]
        %s346 = scalar_lea.vmem [#allocation9], 128
        %v347 = vld [vmem:[%s346] sm:$0xff]
        %v348 = vld [vmem:[%s346 + $0x8] sm:$0xff]
        %v349 = vlaneseq
        %v350 = vshrl.u32 %v349, 7
        %vm351 = vcmp.eq.s32.totalorder %v350, 0
        %v352 = vsel %vm351, 1, 0
        %v353 = vcvt.s32.f32 %v352
        %v354 = vld [vmem:[%s275] sm:$0xff]
        %v355 = vld [vmem:[%s275 + $0x8] sm:$0xff]
        %v356 = vadd.f32 %v354, %v355
        %357 = vadd.xlane.f32.xlu0 %v356
        %v358 = vpop.xlane.xlu0 %357
        %v359 = vrot.slane %v358, 4
        %v360 = vadd.f32 %v358, %v359
        %v361 = vrot.slane %v360, 2
        %v362 = vadd.f32 %v360, %v361
        %v363 = vrot.slane %v362, 1
        %v364 = vadd.f32 %v362, %v363
        %s365 = vtos %v364
        %v366 = vmul.f32 %v354, %v354
        %v367 = vmul.f32 %v355, %v355
        %v368 = vadd.f32 %v366, %v367
        %369 = vadd.xlane.f32.xlu0 %v368
        %v370 = vpop.xlane.xlu0 %369
        %v371 = vrot.slane %v370, 4
        %v372 = vadd.f32 %v370, %v371
        %v373 = vrot.slane %v372, 2
        %v374 = vadd.f32 %v372, %v373
        %v375 = vrot.slane %v374, 1
        %v376 = vadd.f32 %v374, %v375
        %s377 = vtos %v376
        %v378 = vrcp.pop 1024.0
        %s379 = vtos %v378
        %s380 = smul.f32 %s365, %s379
        %v381 = vrcp.pop 1024.0
        %s382 = vtos %v381
        %s383 = smul.f32 %s377, %s382
        %s384 = smul.f32 %s380, %s380
        %s385 = ssub.f32 %s383, %s384
        %s386 = sadd.f32 %s385, 1e-05
        %v387 = vstv %s386
        %v388 = vrsqrt.pop %v387
        %s389 = vtos %v388
        %v390 = vstv %s380
        %v391 = vsub.f32 %v354, %v390
        %v392 = vsub.f32 %v355, %v390
        %v393 = vstv %s389
        %v394 = vmul.f32 %v391, %v393
        %v395 = vmul.f32 %v392, %v393
        %v396 = vmul.f32 %v394, %v320
        %v397 = vmul.f32 %v395, %v321
        %v398 = vadd.f32 %v396, %v322
        %v399 = vadd.f32 %v397, %v323
        %400 = vrot.lane.b32.xlu0 %v398, 17
        %v401 = vpop.permute.xlu0 %400
        %402 = vrot.lane.b32.xlu0 %v399, 17
        %v403 = vpop.permute.xlu0 %402
        %v404 = vlaneseq
        %v405 = vand.u32 %v404, 127
        %vm406 = vcmp.lt.s32.totalorder %v405, 17
        %v407 = vsel %vm406, %v401, %v403
        %v408 = vsel %vm406, %v403, %v401
        %v409 = vmul.f32 %v408, %v326
        %v410 = vmul.f32 %v407, %v327
        %411 = vst [vmem:[#allocation2] sm:$0xff] %v409
        %412 = vst [vmem:[#allocation2 + $0x8] sm:$0xff] %v410
        %413 = vrot.lane.b32.xlu0 %v398, 16
        %v414 = vpop.permute.xlu0 %413
        %415 = vrot.lane.b32.xlu0 %v399, 16
        %v416 = vpop.permute.xlu0 %415
        %vm417 = vcmp.lt.s32.totalorder %v405, 16
        %v418 = vsel %vm417, %v414, %v416
        %v419 = vsel %vm417, %v416, %v414
        %v420 = vmul.f32 %v419, %v329
        %v421 = vmul.f32 %v418, %v330
        %422 = vst [vmem:[#allocation2 + $0x10] sm:$0xff] %v420
        %423 = vst [vmem:[#allocation2 + $0x18] sm:$0xff] %v421
        %424 = vrot.lane.b32.xlu0 %v398, 15
        %v425 = vpop.permute.xlu0 %424
        %426 = vrot.lane.b32.xlu0 %v399, 15
        %v427 = vpop.permute.xlu0 %426
        %vm428 = vcmp.lt.s32.totalorder %v405, 15
        %v429 = vsel %vm428, %v425, %v427
        %v430 = vsel %vm428, %v427, %v425
        %v431 = vmul.f32 %v430, %v332
        %v432 = vmul.f32 %v429, %v333
        %433 = vst [vmem:[#allocation2 + $0x20] sm:$0xff] %v431
        %434 = vst [vmem:[#allocation2 + $0x28] sm:$0xff] %v432
        %435 = vrot.lane.b32.xlu0 %v398, 1
        %v436 = vpop.permute.xlu0 %435
        %437 = vrot.lane.b32.xlu0 %v399, 1
        %v438 = vpop.permute.xlu0 %437
        %vm439 = vcmp.lt.s32.totalorder %v405, 1
        %v440 = vsel %vm439, %v436, %v438
        %v441 = vsel %vm439, %v438, %v436
        %v442 = vmul.f32 %v441, %v335
        %v443 = vmul.f32 %v440, %v336
        %444 = vst [vmem:[#allocation2 + $0x30] sm:$0xff] %v442
        %445 = vst [vmem:[#allocation2 + $0x38] sm:$0xff] %v443
        %446 = vst [vmem:[#allocation2 + $0x40] sm:$0xff] %v398
        %447 = vst [vmem:[#allocation2 + $0x48] sm:$0xff] %v399
        %448 = vrot.lane.b32.xlu0 %v398, 127
        %v449 = vpop.permute.xlu0 %448
        %450 = vrot.lane.b32.xlu0 %v399, 127
        %v451 = vpop.permute.xlu0 %450
        %vm452 = vcmp.lt.s32.totalorder %v405, 127
        %v453 = vsel %vm452, %v449, %v451
        %v454 = vsel %vm452, %v451, %v449
        %v455 = vmul.f32 %v453, %v338
        %v456 = vmul.f32 %v454, %v339
        %457 = vst [vmem:[#allocation2 + $0x50] sm:$0xff] %v455
        %458 = vst [vmem:[#allocation2 + $0x58] sm:$0xff] %v456
        %459 = vrot.lane.b32.xlu0 %v398, 113
        %v460 = vpop.permute.xlu0 %459
        %461 = vrot.lane.b32.xlu0 %v399, 113
        %v462 = vpop.permute.xlu0 %461
        %vm463 = vcmp.lt.s32.totalorder %v405, 113
        %v464 = vsel %vm463, %v460, %v462
        %v465 = vsel %vm463, %v462, %v460
        %v466 = vmul.f32 %v464, %v341
        %v467 = vmul.f32 %v465, %v342
        %468 = vst [vmem:[#allocation2 + $0x60] sm:$0xff] %v466
        %469 = vst [vmem:[#allocation2 + $0x68] sm:$0xff] %v467
        %470 = vrot.lane.b32.xlu0 %v398, 112
        %v471 = vpop.permute.xlu0 %470
        %472 = vrot.lane.b32.xlu0 %v399, 112
        %v473 = vpop.permute.xlu0 %472
        %vm474 = vcmp.lt.s32.totalorder %v405, 112
        %v475 = vsel %vm474, %v471, %v473
        %v476 = vsel %vm474, %v473, %v471
        %v477 = vmul.f32 %v475, %v344
        %v478 = vmul.f32 %v476, %v345
        %479 = vst [vmem:[#allocation2 + $0x70] sm:$0xff] %v477
        %480 = vst [vmem:[#allocation2 + $0x78] sm:$0xff] %v478
        %481 = vrot.lane.b32.xlu0 %v398, 111
        %v482 = vpop.permute.xlu0 %481
        %483 = vrot.lane.b32.xlu0 %v399, 111
        %v484 = vpop.permute.xlu0 %483
        %vm485 = vcmp.lt.s32.totalorder %v405, 111
        %v486 = vsel %vm485, %v482, %v484
        %v487 = vsel %vm485, %v484, %v482
        %v488 = vmul.f32 %v486, %v347
        %v489 = vmul.f32 %v487, %v348
        %490 = vst [vmem:[#allocation2 + $0x80] sm:$0xff] %v488
        %491 = vst [vmem:[#allocation2 + $0x88] sm:$0xff] %v489
        %492 = vst [vmem:[#allocation2 + $0x90] sm:$0xff] %v353
        %493 = vst [vmem:[#allocation2 + $0x98] sm:$0xff] %v353
        %v494 = vld [vmem:[#allocation2] sm:$0xff]
        %v495 = vld [vmem:[#allocation2 + $0x8] sm:$0xff]
        %v496 = vld [vmem:[#allocation2 + $0x10] sm:$0xff]
        %v497 = vld [vmem:[#allocation2 + $0x18] sm:$0xff]
        %v498 = vld [vmem:[#allocation2 + $0x20] sm:$0xff]
        %v499 = vld [vmem:[#allocation2 + $0x28] sm:$0xff]
        %v500 = vld [vmem:[#allocation2 + $0x30] sm:$0xff]
        %v501 = vld [vmem:[#allocation2 + $0x38] sm:$0xff]
        %v502 = vld [vmem:[#allocation2 + $0x40] sm:$0xff]
        %v503 = vld [vmem:[#allocation2 + $0x48] sm:$0xff]
        %v504 = vld [vmem:[#allocation2 + $0x50] sm:$0xff]
        %v505 = vld [vmem:[#allocation2 + $0x58] sm:$0xff]
        %v506 = vld [vmem:[#allocation2 + $0x60] sm:$0xff]
        %v507 = vld [vmem:[#allocation2 + $0x68] sm:$0xff]
        %v508 = vld [vmem:[#allocation2 + $0x70] sm:$0xff]
        %v509 = vld [vmem:[#allocation2 + $0x78] sm:$0xff]
        %v510 = vld [vmem:[#allocation2 + $0x80] sm:$0xff]
        %v511 = vld [vmem:[#allocation2 + $0x88] sm:$0xff]
        %v512 = vld [vmem:[#allocation2 + $0x90] sm:$0xff]
        %v513 = vld [vmem:[#allocation2 + $0x98] sm:$0xff]
        %vm514 = vcmask 654336
        %v516 = vsel %vm514, %v324, 0
        %518 = vmatprep.subr.mxu0 0.0
        %519 = vmatpush1.msra.mxu0 0.0
        %520 = vmatprep.subr.mxu0 0.0
        %521 = vmatpush1.msra.mxu0 0.0
        %522 = vmatprep.subr.mxu0 0.0
        %523 = vmatpush1.msra.mxu0 0.0
        %524 = vmatprep.subr.mxu0 0.0
        %525 = vmatpush1.msra.mxu0 0.0
        %526 = vmatprep.subr.mxu0 0.0
        %527 = vmatpush1.msra.mxu0 0.0
        %528 = vmatprep.subr.mxu0 0.0
        %529 = vmatpush1.msra.mxu0 0.0
        %530 = vmatprep.subr.mxu0 %v513
        %531 = vmatpush1.msra.mxu0 %v512
        %532 = vmatprep.subr.mxu0 %v511
        %533 = vmatpush1.msra.mxu0 %v510
        %534 = vmatprep.subr.mxu0 %v509
        %535 = vmatpush1.msra.mxu0 %v508
        %536 = vmatprep.subr.mxu0 %v507
        %537 = vmatpush1.msra.mxu0 %v506
        %538 = vmatprep.subr.mxu0 %v505
        %539 = vmatpush1.msra.mxu0 %v504
        %540 = vmatprep.subr.mxu0 %v503
        %541 = vmatpush1.msra.mxu0 %v502
        %542 = vmatprep.subr.mxu0 %v501
        %543 = vmatpush1.msra.mxu0 %v500
        %544 = vmatprep.subr.mxu0 %v499
        %545 = vmatpush1.msra.mxu0 %v498
        %546 = vmatprep.subr.mxu0 %v497
        %547 = vmatpush1.msra.mxu0 %v496
        %548 = vmatprep.subr.mxu0 %v495
        %549 = vmatpush1.msra.mxu0 %v494
        %550 = vmatprep.subr.mxu0 0.0
        %551 = vmatpush2.msra.mxu0 0.0
        %552 = vmatprep.subr.mxu0 0.0
        %553 = vmatpush2.msra.mxu0 0.0
        %554 = vmatprep.subr.mxu0 0.0
        %555 = vmatpush2.msra.mxu0 0.0
        %556 = vmatprep.subr.mxu0 0.0
        %557 = vmatpush2.msra.mxu0 0.0
        %558 = vmatprep.subr.mxu0 0.0
        %559 = vmatpush2.msra.mxu0 0.0
        %560 = vmatprep.subr.mxu0 0.0
        %561 = vmatpush2.msra.mxu0 0.0
        %562 = vmatprep.subr.mxu0 0.0
        %563 = vmatpush2.msra.mxu0 0.0
        %564 = vmatprep.subr.mxu0 0.0
        %565 = vmatpush2.msra.mxu0 0.0
        %566 = vmatprep.subr.mxu0 0.0
        %567 = vmatpush2.msra.mxu0 0.0
        %568 = vmatprep.subr.mxu0 0.0
        %569 = vmatpush2.msra.mxu0 0.0
        %570 = vmatprep.subr.mxu0 0.0
        %571 = vmatpush2.msra.mxu0 0.0
        %572 = vmatprep.subr.mxu0 0.0
        %573 = vmatpush2.msra.mxu0 0.0
        %574 = vmatprep.subr.mxu0 0.0
        %575 = vmatpush2.msra.mxu0 0.0
        %576 = vmatprep.subr.mxu0 0.0
        %577 = vmatpush2.msra.mxu0 0.0
        %578 = vmatprep.subr.mxu0 0.0
        %579 = vmatpush2.msra.mxu0 0.0
        %580 = vmatprep.subr.mxu0 0.0
        %581 = vmatpush2.msra.mxu0 0.0
        %582 = vmatprep.mubr.f32.mxu0 0.0
        %583 = vmatmul.mubr.f32.gmra.mxu0 %v516
        %v584 = vpop.f32.mrf.mxu0
        %v585 = vadd.f32 0.0, %v584
        %v586 = vpop.f32.mrf.mxu0
        %v587 = vadd.f32 0.0, %v586
        %588 = vdwg.mxu0
        %v589 = vxor.u32 %v585, 2147483648
        %v590 = vxor.u32 %v587, 2147483648
        %v591 = vmul.f32 %v589, 1.442695
        %v592 = vpow.pop %v591
        %v593 = vmul.f32 %v590, 1.442695
        %v594 = vpow.pop %v593
        %v595 = vadd.f32 %v592, 1.0
        %v596 = vadd.f32 %v594, 1.0
        %v597 = vrcp.pop %v595
        %v598 = vmul.f32 1.0, %v597
        %v599 = vrcp.pop %v596
        %v600 = vmul.f32 1.0, %v599
        %v601 = vmul.f32 %v585, %v598
        %v602 = vmul.f32 %v587, %v600
        %603 = vrot.lane.b32.xlu0 %v601, 17
        %v604 = vpop.permute.xlu0 %603
        %605 = vrot.lane.b32.xlu0 %v602, 17
        %v606 = vpop.permute.xlu0 %605
        %v607 = vsel %vm406, %v604, %v606
        %v608 = vsel %vm406, %v606, %v604
        %v609 = vmul.f32 %v608, %v326
        %v610 = vmul.f32 %v607, %v327
        %611 = vst [vmem:[#allocation2] sm:$0xff] %v609
        %612 = vst [vmem:[#allocation2 + $0x8] sm:$0xff] %v610
        %613 = vrot.lane.b32.xlu0 %v601, 16
        %v614 = vpop.permute.xlu0 %613
        %615 = vrot.lane.b32.xlu0 %v602, 16
        %v616 = vpop.permute.xlu0 %615
        %v617 = vsel %vm417, %v614, %v616
        %v618 = vsel %vm417, %v616, %v614
        %v619 = vmul.f32 %v618, %v329
        %v620 = vmul.f32 %v617, %v330
        %621 = vst [vmem:[#allocation2 + $0x10] sm:$0xff] %v619
        %622 = vst [vmem:[#allocation2 + $0x18] sm:$0xff] %v620
        %623 = vrot.lane.b32.xlu0 %v601, 15
        %v624 = vpop.permute.xlu0 %623
        %625 = vrot.lane.b32.xlu0 %v602, 15
        %v626 = vpop.permute.xlu0 %625
        %v627 = vsel %vm428, %v624, %v626
        %v628 = vsel %vm428, %v626, %v624
        %v629 = vmul.f32 %v628, %v332
        %v630 = vmul.f32 %v627, %v333
        %631 = vst [vmem:[#allocation2 + $0x20] sm:$0xff] %v629
        %632 = vst [vmem:[#allocation2 + $0x28] sm:$0xff] %v630
        %633 = vrot.lane.b32.xlu0 %v601, 1
        %v634 = vpop.permute.xlu0 %633
        %635 = vrot.lane.b32.xlu0 %v602, 1
        %v636 = vpop.permute.xlu0 %635
        %v637 = vsel %vm439, %v634, %v636
        %v638 = vsel %vm439, %v636, %v634
        %v639 = vmul.f32 %v638, %v335
        %v640 = vmul.f32 %v637, %v336
        %641 = vst [vmem:[#allocation2 + $0x30] sm:$0xff] %v639
        %642 = vst [vmem:[#allocation2 + $0x38] sm:$0xff] %v640
        %643 = vst [vmem:[#allocation2 + $0x40] sm:$0xff] %v601
        %644 = vst [vmem:[#allocation2 + $0x48] sm:$0xff] %v602
        %645 = vrot.lane.b32.xlu0 %v601, 127
        %v646 = vpop.permute.xlu0 %645
        %647 = vrot.lane.b32.xlu0 %v602, 127
        %v648 = vpop.permute.xlu0 %647
        %v649 = vsel %vm452, %v646, %v648
        %v650 = vsel %vm452, %v648, %v646
        %v651 = vmul.f32 %v649, %v338
        %v652 = vmul.f32 %v650, %v339
        %653 = vst [vmem:[#allocation2 + $0x50] sm:$0xff] %v651
        %654 = vst [vmem:[#allocation2 + $0x58] sm:$0xff] %v652
        %655 = vrot.lane.b32.xlu0 %v601, 113
        %v656 = vpop.permute.xlu0 %655
        %657 = vrot.lane.b32.xlu0 %v602, 113
        %v658 = vpop.permute.xlu0 %657
        %v659 = vsel %vm463, %v656, %v658
        %v660 = vsel %vm463, %v658, %v656
        %v661 = vmul.f32 %v659, %v341
        %v662 = vmul.f32 %v660, %v342
        %663 = vst [vmem:[#allocation2 + $0x60] sm:$0xff] %v661
        %664 = vst [vmem:[#allocation2 + $0x68] sm:$0xff] %v662
        %665 = vrot.lane.b32.xlu0 %v601, 112
        %v666 = vpop.permute.xlu0 %665
        %667 = vrot.lane.b32.xlu0 %v602, 112
        %v668 = vpop.permute.xlu0 %667
        %v669 = vsel %vm474, %v666, %v668
        %v670 = vsel %vm474, %v668, %v666
        %v671 = vmul.f32 %v669, %v344
        %v672 = vmul.f32 %v670, %v345
        %673 = vst [vmem:[#allocation2 + $0x70] sm:$0xff] %v671
        %674 = vst [vmem:[#allocation2 + $0x78] sm:$0xff] %v672
        %675 = vrot.lane.b32.xlu0 %v601, 111
        %v676 = vpop.permute.xlu0 %675
        %677 = vrot.lane.b32.xlu0 %v602, 111
        %v678 = vpop.permute.xlu0 %677
        %v679 = vsel %vm485, %v676, %v678
        %v680 = vsel %vm485, %v678, %v676
        %v681 = vmul.f32 %v679, %v347
        %v682 = vmul.f32 %v680, %v348
        %683 = vst [vmem:[#allocation2 + $0x80] sm:$0xff] %v681
        %684 = vst [vmem:[#allocation2 + $0x88] sm:$0xff] %v682
        %685 = vst [vmem:[#allocation2 + $0x90] sm:$0xff] %v353
        %686 = vst [vmem:[#allocation2 + $0x98] sm:$0xff] %v353
        %v687 = vld [vmem:[#allocation2] sm:$0xff]
        %v688 = vld [vmem:[#allocation2 + $0x8] sm:$0xff]
        %v689 = vld [vmem:[#allocation2 + $0x10] sm:$0xff]
        %v690 = vld [vmem:[#allocation2 + $0x18] sm:$0xff]
        %v691 = vld [vmem:[#allocation2 + $0x20] sm:$0xff]
        %v692 = vld [vmem:[#allocation2 + $0x28] sm:$0xff]
        %v693 = vld [vmem:[#allocation2 + $0x30] sm:$0xff]
        %v694 = vld [vmem:[#allocation2 + $0x38] sm:$0xff]
        %v695 = vld [vmem:[#allocation2 + $0x40] sm:$0xff]
        %v696 = vld [vmem:[#allocation2 + $0x48] sm:$0xff]
        %v697 = vld [vmem:[#allocation2 + $0x50] sm:$0xff]
        %v698 = vld [vmem:[#allocation2 + $0x58] sm:$0xff]
        %v699 = vld [vmem:[#allocation2 + $0x60] sm:$0xff]
        %v700 = vld [vmem:[#allocation2 + $0x68] sm:$0xff]
        %v701 = vld [vmem:[#allocation2 + $0x70] sm:$0xff]
        %v702 = vld [vmem:[#allocation2 + $0x78] sm:$0xff]
        %v703 = vld [vmem:[#allocation2 + $0x80] sm:$0xff]
        %v704 = vld [vmem:[#allocation2 + $0x88] sm:$0xff]
        %v705 = vld [vmem:[#allocation2 + $0x90] sm:$0xff]
        %v706 = vld [vmem:[#allocation2 + $0x98] sm:$0xff]
        %v708 = vsel %vm514, %v325, 0
        %710 = vmatprep.subr.mxu0 0.0
        %711 = vmatpush1.msra.mxu0 0.0
        %712 = vmatprep.subr.mxu0 0.0
        %713 = vmatpush1.msra.mxu0 0.0
        %714 = vmatprep.subr.mxu0 0.0
        %715 = vmatpush1.msra.mxu0 0.0
        %716 = vmatprep.subr.mxu0 0.0
        %717 = vmatpush1.msra.mxu0 0.0
        %718 = vmatprep.subr.mxu0 0.0
        %719 = vmatpush1.msra.mxu0 0.0
        %720 = vmatprep.subr.mxu0 0.0
        %721 = vmatpush1.msra.mxu0 0.0
        %722 = vmatprep.subr.mxu0 %v706
        %723 = vmatpush1.msra.mxu0 %v705
        %724 = vmatprep.subr.mxu0 %v704
        %725 = vmatpush1.msra.mxu0 %v703
        %726 = vmatprep.subr.mxu0 %v702
        %727 = vmatpush1.msra.mxu0 %v701
        %728 = vmatprep.subr.mxu0 %v700
        %729 = vmatpush1.msra.mxu0 %v699
        %730 = vmatprep.subr.mxu0 %v698
        %731 = vmatpush1.msra.mxu0 %v697
        %732 = vmatprep.subr.mxu0 %v696
        %733 = vmatpush1.msra.mxu0 %v695
        %734 = vmatprep.subr.mxu0 %v694
        %735 = vmatpush1.msra.mxu0 %v693
        %736 = vmatprep.subr.mxu0 %v692
        %737 = vmatpush1.msra.mxu0 %v691
        %738 = vmatprep.subr.mxu0 %v690
        %739 = vmatpush1.msra.mxu0 %v689
        %740 = vmatprep.subr.mxu0 %v688
        %741 = vmatpush1.msra.mxu0 %v687
        %742 = vmatprep.subr.mxu0 0.0
        %743 = vmatpush2.msra.mxu0 0.0
        %744 = vmatprep.subr.mxu0 0.0
        %745 = vmatpush2.msra.mxu0 0.0
        %746 = vmatprep.subr.mxu0 0.0
        %747 = vmatpush2.msra.mxu0 0.0
        %748 = vmatprep.subr.mxu0 0.0
        %749 = vmatpush2.msra.mxu0 0.0
        %750 = vmatprep.subr.mxu0 0.0
        %751 = vmatpush2.msra.mxu0 0.0
        %752 = vmatprep.subr.mxu0 0.0
        %753 = vmatpush2.msra.mxu0 0.0
        %754 = vmatprep.subr.mxu0 0.0
        %755 = vmatpush2.msra.mxu0 0.0
        %756 = vmatprep.subr.mxu0 0.0
        %757 = vmatpush2.msra.mxu0 0.0
        %758 = vmatprep.subr.mxu0 0.0
        %759 = vmatpush2.msra.mxu0 0.0
        %760 = vmatprep.subr.mxu0 0.0
        %761 = vmatpush2.msra.mxu0 0.0
        %762 = vmatprep.subr.mxu0 0.0
        %763 = vmatpush2.msra.mxu0 0.0
        %764 = vmatprep.subr.mxu0 0.0
        %765 = vmatpush2.msra.mxu0 0.0
        %766 = vmatprep.subr.mxu0 0.0
        %767 = vmatpush2.msra.mxu0 0.0
        %768 = vmatprep.subr.mxu0 0.0
        %769 = vmatpush2.msra.mxu0 0.0
        %770 = vmatprep.subr.mxu0 0.0
        %771 = vmatpush2.msra.mxu0 0.0
        %772 = vmatprep.subr.mxu0 0.0
        %773 = vmatpush2.msra.mxu0 0.0
        %774 = vmatprep.mubr.f32.mxu0 0.0
        %775 = vmatmul.mubr.f32.gmra.mxu0 %v708
        %v776 = vpop.f32.mrf.mxu0
        %v777 = vadd.f32 0.0, %v776
        %v778 = vpop.f32.mrf.mxu0
        %v779 = vadd.f32 0.0, %v778
        %780 = vdwg.mxu0
        %v781 = vxor.u32 %v777, 2147483648
        %v782 = vxor.u32 %v779, 2147483648
        %v783 = vmul.f32 %v781, 1.442695
        %v784 = vpow.pop %v783
        %v785 = vmul.f32 %v782, 1.442695
        %v786 = vpow.pop %v785
        %v787 = vadd.f32 %v784, 1.0
        %v788 = vadd.f32 %v786, 1.0
        %v789 = vrcp.pop %v787
        %v790 = vmul.f32 1.0, %v789
        %v791 = vrcp.pop %v788
        %v792 = vmul.f32 1.0, %v791
        %v793 = vmul.f32 %v777, %v790
        %v794 = vmul.f32 %v779, %v792
        %795 = vst [vmem:[%s319] sm:$0xff] %v793
        %796 = vst [vmem:[%s319 + $0x8] sm:$0xff] %v794
        %s797 = sand.u32 %s164, 1
        %s798 = scalar_lea.sflag [#allocation5], %s797
        %s799 = sand.u32 %s164, 1
        %s800 = smul.addr %s799, 16
        %s801 = scalar_lea.vmem [#allocation12], %s800
        // Predicated region
        $region65: #{tpu_custom_call.1} parent=43 // pred_check
          %p802 = pneg %p174
        $region66: #{tpu_custom_call.1} parent=43 // pred_check_branch
          %804 = sbr.rel (%p802) target = $region68
        $region67: #{tpu_custom_call.1} parent=43 // pred_region
          %s806 = ssub.s32 256, 256
          %807 = vsyncadd %s798, %s806
          %s808 = smul.addr %s25, 2
          %s809 = smul.addr %s808, 128
          %s810 = scalar_lea.hbm %s6, %s809
          %s812 = sshll.u32 %s801, 4
          %s813 = int_to_ptr.vmem [resolvable:$true] %s812
          %815 = dma.vmem_to_hbm [thread:$0]  %s813, 256, %s810, %s798
        $region68: #{tpu_custom_call.1} parent=43 // pred_fallthru
          _
      $region44: #{tpu_custom_call.1} parent=5 // pred_fallthru
        _
      %p816 = scmp.le.s32.totalorder 2, %s20
      // Predicated region
      $region69: #{tpu_custom_call.1} parent=5 // pred_check
        %p817 = pneg %p816
      $region70: #{tpu_custom_call.1} parent=5 // pred_check_branch
        %819 = sbr.rel (%p817) target = $region72
      $region71: #{tpu_custom_call.1} parent=5 // pred_region
        %s820 = ssub.s32 %s20, 2
        // Predicated region
        $region73: #{tpu_custom_call.1} parent=71 // pred_check
          %p821 = pneg %p180
        $region74: #{tpu_custom_call.1} parent=71 // pred_check_branch
          %823 = sbr.rel (%p821) target = $region76
        $region75: #{tpu_custom_call.1} parent=71 // pred_region
          %s824 = sand.u32 %s165, 1
          %s825 = scalar_lea.sflag [#allocation5], %s824
          %s826 = sand.u32 %s165, 1
          %s827 = smul.addr %s826, 16
          %s828 = scalar_lea.vmem [#allocation12], %s827
          %829 = dma.done %s825, 256
        $region76: #{tpu_custom_call.1} parent=71 // pred_fallthru
          _
      $region72: #{tpu_custom_call.1} parent=5 // pred_fallthru
        _
    $region6: #{tpu_custom_call.1} parent=1 // loop_footer
      %s24 = sadd.s32 1, %s20
    $region7: #{tpu_custom_call.1} parent=1 // loop_footer_branch
      %19 = sbr.rel target = $region3
    $region8: #{tpu_custom_call.1} parent=1 // loop_exit
      _
    %830 = vsyncpa [#allocation4], 1
    %s831 = scalar_lea.sflag [#allocation4], 1
    %832 = vsyncpa %s831, 1
    %833 = vsyncpa [#allocation7], 1
    %834 = vsyncpa [#allocation10], 1
    %835 = vsyncpa [#allocation5], 1
    %s836 = scalar_lea.sflag [#allocation5], 1
    %837 = vsyncpa %s836, 1

</llo_original>
